<compile_context>
chip_gen: v7x
topology: tpu7x:2x2x1
jax: 0.10.0
libtpu: 0.0.40
codegen_flags: <defaults>
</compile_context>

<pallas_src>
import functools

import jax
import jax.numpy as jnp
from jax.experimental import pallas as pl
from jax.experimental.pallas import tpu as pltpu


_SUBLANE = 8
_VMEM_BUDGET = 40 * 1024 * 1024   # tile-shrink target (safe margin under v7x 64 MiB)
_VMEM_LIMIT = 48 * 1024 * 1024    # > v5e's 16 MiB scoped default, < v7x physical


def _round_up(n, m):
    return (n + m - 1) // m * m


# ------------------------------ kernels ------------------------------------


def _resblock_kernel_shortcut(x_ref, w0_ref, b0_ref, w1_ref, b1_ref, ws_ref,
                              o_ref, *, compute_dtype):
    """One row-tile of the FC ResNet block, Linear shortcut (size_in != size_out)."""
    xc = x_ref[...].astype(compute_dtype)              # in-kernel cast (VPU)
    # net = fc_0(relu(x))   -- MXU, f32 accumulation
    h = jnp.dot(jnp.maximum(xc, 0), w0_ref[...].astype(compute_dtype),
                preferred_element_type=jnp.float32) + b0_ref[...].astype(jnp.float32)
    # dx = fc_1(relu(net))
    dx = jnp.dot(jnp.maximum(h, 0.0).astype(compute_dtype),
                 w1_ref[...].astype(compute_dtype),
                 preferred_element_type=jnp.float32) + b1_ref[...].astype(jnp.float32)
    # x_s = shortcut(x)  (no bias)
    x_s = jnp.dot(xc, ws_ref[...].astype(compute_dtype),
                  preferred_element_type=jnp.float32)
    o_ref[...] = (x_s + dx).astype(o_ref.dtype)


def _resblock_kernel_identity(x_ref, w0_ref, b0_ref, w1_ref, b1_ref, o_ref, *,
                              compute_dtype):
    """One row-tile of the FC ResNet block, identity shortcut (f32 residual)."""
    x = x_ref[...]
    xc = x.astype(compute_dtype)
    h = jnp.dot(jnp.maximum(xc, 0), w0_ref[...].astype(compute_dtype),
                preferred_element_type=jnp.float32) + b0_ref[...].astype(jnp.float32)
    dx = jnp.dot(jnp.maximum(h, 0.0).astype(compute_dtype),
                 w1_ref[...].astype(compute_dtype),
                 preferred_element_type=jnp.float32) + b1_ref[...].astype(jnp.float32)
    # exact module semantics: residual added in f32, not in bf16
    o_ref[...] = (x.astype(jnp.float32) + dx).astype(o_ref.dtype)


# ------------------------------ wrapper -------------------------------------


@functools.partial(jax.jit,
                   static_argnames=("row_tile", "compute_dtype", "out_dtype"))
def resnet_block_fc(x, params, row_tile=512, compute_dtype=jnp.bfloat16,
                    out_dtype=None):
    """Apply the FC ResNet block to x of shape [..., size_in]."""
    size_in = x.shape[-1]
    w0_t, b0, w1_t, b1 = (params["w0_t"], params["b0"], params["w1_t"],
                          params["b1"])
    ws_t = params.get("ws_t", None)
    size_h = w0_t.shape[1]
    size_out = w1_t.shape[1]
    if out_dtype is None:
        out_dtype = x.dtype

    lead = x.shape[:-1]
    rows = 1
    for d in lead:
        rows *= d
    if rows == 0:                       # empty leading dims: nothing to do
        return jnp.zeros((*lead, size_out), out_dtype)

    x2 = x.reshape(rows, size_in)       # metadata-only; no pad, no cast

    # ---- row tile: amortize per-step cost, but keep >= ~4 grid steps so the
    # second v7x TensorCore gets work and the pipeline has overlap. -----------
    tile = min(int(row_tile), _round_up(max(1, pl.cdiv(rows, 4)), _SUBLANE))
    tile = max(_SUBLANE, _round_up(tile, _SUBLANE))

    # ---- honest VMEM budget: double-buffered resident weights/biases,
    # double-buffered streamed x/out blocks, in-kernel bf16/f32 intermediates.
    x_item = jnp.dtype(x.dtype).itemsize
    o_item = jnp.dtype(out_dtype).itemsize
    c_item = jnp.dtype(compute_dtype).itemsize
    w_bytes = (w0_t.size * w0_t.dtype.itemsize +
               w1_t.size * w1_t.dtype.itemsize +
               b0.size * b0.dtype.itemsize + b1.size * b1.dtype.itemsize)
    if ws_t is not None:
        w_bytes += ws_t.size * ws_t.dtype.itemsize
    resident = 2 * w_bytes                               # default double-buffering
    resident += c_item * (size_in * size_h + size_h * size_out +
                          (size_in * size_out if ws_t is not None else 0))

    def _vmem_need(t):
        stream = 2 * t * (size_in * x_item + size_out * o_item)
        interm = t * (size_in * (4 + c_item) + size_h * (4 + c_item) +
                      size_out * 8)
        return resident + stream + interm

    while tile > _SUBLANE and _vmem_need(tile) > _VMEM_BUDGET:
        tile = _round_up(max(_SUBLANE, tile // 2), _SUBLANE)

    grid = (pl.cdiv(rows, tile),)   # trailing partial block: OOB rows dropped

    # ---- specs: x / out streamed over rows at true feature width; weights and
    # biases grid-resident via constant index_maps. ---------------------------
    x_spec = pl.BlockSpec((tile, size_in), lambda i: (i, 0))
    o_spec = pl.BlockSpec((tile, size_out), lambda i: (i, 0))
    w0_spec = pl.BlockSpec((size_in, size_h), lambda i: (0, 0))
    b0_spec = pl.BlockSpec((1, size_h), lambda i: (0, 0))
    w1_spec = pl.BlockSpec((size_h, size_out), lambda i: (0, 0))
    b1_spec = pl.BlockSpec((1, size_out), lambda i: (0, 0))
    # TODO(synk): single-buffer the constant-index weight/bias specs with
    #             pipeline_mode=pl.Buffered(1) (and deepen x buffering on v5e)
    #             once Buffered(1) support is confirmed on the target jaxlib.

    flops = 2 * rows * (size_in * size_h + size_h * size_out)
    bytes_accessed = (rows * size_in * x_item + rows * size_out * o_item +
                      w_bytes)

    cparams = pltpu.CompilerParams(dimension_semantics=("parallel",),
                                   vmem_limit_bytes=_VMEM_LIMIT)

    if ws_t is not None:
        ws_spec = pl.BlockSpec((size_in, size_out), lambda i: (0, 0))
        flops += 2 * rows * size_in * size_out
        bytes_accessed += 0  # ws already counted in w_bytes
        kernel = functools.partial(_resblock_kernel_shortcut,
                                   compute_dtype=compute_dtype)
        out2 = pl.pallas_call(
            kernel,
            out_shape=jax.ShapeDtypeStruct((rows, size_out), out_dtype),
            grid_spec=pltpu.PrefetchScalarGridSpec(
                num_scalar_prefetch=0, grid=grid,
                in_specs=[x_spec, w0_spec, b0_spec, w1_spec, b1_spec, ws_spec],
                out_specs=o_spec),
            compiler_params=cparams,
            cost_estimate=pl.CostEstimate(flops=flops, transcendentals=0,
                                          bytes_accessed=bytes_accessed),
        )(x2, w0_t, b0, w1_t, b1, ws_t)
    else:
        kernel = functools.partial(_resblock_kernel_identity,
                                   compute_dtype=compute_dtype)
        out2 = pl.pallas_call(
            kernel,
            out_shape=jax.ShapeDtypeStruct((rows, size_out), out_dtype),
            grid_spec=pltpu.PrefetchScalarGridSpec(
                num_scalar_prefetch=0, grid=grid,
                in_specs=[x_spec, w0_spec, b0_spec, w1_spec, b1_spec],
                out_specs=o_spec),
            compiler_params=cparams,
            cost_estimate=pl.CostEstimate(flops=flops, transcendentals=0,
                                          bytes_accessed=bytes_accessed),
        )(x2, w0_t, b0, w1_t, b1)

    return out2.reshape(*lead, size_out)


# ------------------------- parameter construction ---------------------------


def init_resnet_block_fc(key, size_in, size_out=None, size_h=None,
                         init_as_zero=False):
    """Deterministic init mirroring ResnetBlockFC.__init__ (beta=0 -> ReLU)."""
    if size_out is None:
        size_out = size_in
    if size_h is None:
        size_h = min(size_in, size_out)

    k0, ks = jax.random.split(key)

    # fc_0: kaiming_normal_(mode='fan_in', a=0) -> std = sqrt(2 / fan_in)
    if init_as_zero:
        w0 = jnp.zeros((size_h, size_in), jnp.float32)
    else:
        w0 = jax.random.normal(k0, (size_h, size_in), jnp.float32) * jnp.sqrt(
            2.0 / size_in)
    b0 = jnp.zeros((size_h,), jnp.float32)

    # fc_1: zero weight, zero bias.
    w1 = jnp.zeros((size_out, size_h), jnp.float32)
    b1 = jnp.zeros((size_out,), jnp.float32)

    params = {
        "w0_t": w0.T,                      # [size_in, size_h]
        "b0": b0.reshape(1, size_h),
        "w1_t": w1.T,                      # [size_h, size_out]
        "b1": b1.reshape(1, size_out),
    }

    if size_in != size_out:
        ws = jax.random.normal(ks, (size_out, size_in), jnp.float32) * jnp.sqrt(
            2.0 / size_in)
        params["ws_t"] = ws.T              # [size_in, size_out]

    return params, (size_in, size_h, size_out)


# ------------------------------ reference -----------------------------------


def resnet_block_fc_ref(x, params, compute_dtype=jnp.bfloat16):
    """Pure-JAX reference mirroring the kernel's bf16-operand / f32-accum recipe."""
    cd = compute_dtype
    xc = x.astype(cd)
    h = jnp.dot(jnp.maximum(xc, 0), params["w0_t"].astype(cd),
                preferred_element_type=jnp.float32) + params["b0"][0]
    dx = jnp.dot(jnp.maximum(h, 0.0).astype(cd), params["w1_t"].astype(cd),
                 preferred_element_type=jnp.float32) + params["b1"][0]
    if "ws_t" in params:
        x_s = jnp.dot(xc, params["ws_t"].astype(cd),
                      preferred_element_type=jnp.float32)
    else:
        x_s = x.astype(jnp.float32)        # f32 residual (exact semantics)
    return (x_s + dx).astype(x.dtype)


# --------------------------------- main --------------------------------------


if __name__ == "__main__":
    key = jax.random.PRNGKey(0)
    kx, kp1, kp2, kx3, kw3 = jax.random.split(key, 5)

    # x: [batch=2, seq=16, size_in=32]  (leading dims are flattened to rows)
    batch, seq, size_in = 2, 16, 32
    x = jax.random.normal(kx, (batch, seq, size_in), jnp.float32)

    # Case 1: size_in != size_out -> Linear shortcut path.
    params1, (_, _, size_out1) = init_resnet_block_fc(kp1, size_in, size_out=48)
    out1 = resnet_block_fc(x, params1)
    jax.block_until_ready(out1)
    ref1 = resnet_block_fc_ref(x.reshape(-1, size_in), params1).reshape(
        batch, seq, size_out1)
    assert out1.shape == (batch, seq, size_out1)
    assert jnp.allclose(out1, ref1, atol=1e-2, rtol=1e-2)

    # Case 2: size_in == size_out -> identity shortcut path (f32 residual).
    params2, (_, _, size_out2) = init_resnet_block_fc(kp2, size_in)
    out2 = resnet_block_fc(x, params2)
    jax.block_until_ready(out2)
    ref2 = resnet_block_fc_ref(x.reshape(-1, size_in), params2).reshape(
        batch, seq, size_out2)
    assert out2.shape == (batch, seq, size_out2)
    assert jnp.allclose(out2, ref2, atol=1e-2, rtol=1e-2)

    # Case 3: non-multiple-of-8 row count + non-zero fc_1 weights (full data
    # path, trailing partial row block exercised).
    x3 = jax.random.normal(kx3, (3, 5, size_in), jnp.float32)
    params3, _ = init_resnet_block_fc(kp1, size_in, size_out=48)
    params3 = dict(params3)
    params3["w1_t"] = jax.random.normal(
        kw3, params3["w1_t"].shape, jnp.float32) * 0.1
    out3 = resnet_block_fc(x3, params3)
    jax.block_until_ready(out3)
    ref3 = resnet_block_fc_ref(x3.reshape(-1, size_in), params3).reshape(
        3, 5, 48)
    assert out3.shape == (3, 5, 48)
    assert jnp.allclose(out3, ref3, atol=1e-2, rtol=1e-2)

    print("KERNEL_OK")
</pallas_src>

<mosaic_0001>
module attributes {stable_mosaic.version = 11 : i64} {
  func.func @_resblock_kernel_shortcut(%arg0: i32, %arg1: memref<8x32xf32, #tpu.memory_space<vmem>>, %arg2: memref<32x32xf32, #tpu.memory_space<vmem>>, %arg3: memref<1x32xf32, #tpu.memory_space<vmem>>, %arg4: memref<32x48xf32, #tpu.memory_space<vmem>>, %arg5: memref<1x48xf32, #tpu.memory_space<vmem>>, %arg6: memref<32x48xf32, #tpu.memory_space<vmem>>, %arg7: memref<8x48xf32, #tpu.memory_space<vmem>>) attributes {dimension_semantics = [#tpu.dimension_semantics<parallel>], iteration_bounds = array<i64: 4>, scalar_prefetch = 0 : i64, scratch_operands = 0 : i64, tpu.core_type = #tpu.core_type<tc>, window_params = [{transform_indices = @transform_0, window_bounds = array<i64: 8, 32>}, {pipeline_mode = #tpu.pipeline_mode<synchronous>, transform_indices = @transform_1, window_bounds = array<i64: 32, 32>}, {pipeline_mode = #tpu.pipeline_mode<synchronous>, transform_indices = @transform_2, window_bounds = array<i64: 1, 32>}, {pipeline_mode = #tpu.pipeline_mode<synchronous>, transform_indices = @transform_3, window_bounds = array<i64: 32, 48>}, {pipeline_mode = #tpu.pipeline_mode<synchronous>, transform_indices = @transform_4, window_bounds = array<i64: 1, 48>}, {pipeline_mode = #tpu.pipeline_mode<synchronous>, transform_indices = @transform_5, window_bounds = array<i64: 32, 48>}, {transform_indices = @transform_6, window_bounds = array<i64: 8, 48>}]} {
    %c0 = arith.constant 0 : index
    %c0_0 = arith.constant 0 : index
    %0 = vector.load %arg1[%c0, %c0_0] : memref<8x32xf32, #tpu.memory_space<vmem>>, vector<8x32xf32>
    %1 = arith.truncf %0 : vector<8x32xf32> to vector<8x32xbf16>
    %cst = arith.constant 0.000000e+00 : bf16
    %2 = vector.broadcast %cst : bf16 to vector<8x32xbf16>
    %3 = arith.maximumf %1, %2 : vector<8x32xbf16>
    %c0_1 = arith.constant 0 : index
    %c0_2 = arith.constant 0 : index
    %4 = vector.load %arg2[%c0_1, %c0_2] : memref<32x32xf32, #tpu.memory_space<vmem>>, vector<32x32xf32>
    %5 = arith.truncf %4 : vector<32x32xf32> to vector<32x32xbf16>
    %cst_3 = arith.constant dense<0.000000e+00> : vector<8x32xf32>
    %6 = tpu.matmul %3, %5, %cst_3 {dimension_numbers = #tpu.dot_dimension_numbers<[1], [0], [0], [1], [0, 0, 1, 1], [], []>} : vector<8x32xbf16>, vector<32x32xbf16>, vector<8x32xf32> -> vector<8x32xf32>
    %c0_4 = arith.constant 0 : index
    %c0_5 = arith.constant 0 : index
    %7 = vector.load %arg3[%c0_4, %c0_5] : memref<1x32xf32, #tpu.memory_space<vmem>>, vector<1x32xf32>
    %8 = vector.broadcast %7 : vector<1x32xf32> to vector<8x32xf32>
    %9 = arith.addf %6, %8 : vector<8x32xf32>
    %cst_6 = arith.constant 0.000000e+00 : f32
    %10 = vector.broadcast %cst_6 : f32 to vector<8x32xf32>
    %11 = arith.maximumf %9, %10 : vector<8x32xf32>
    %12 = arith.truncf %11 : vector<8x32xf32> to vector<8x32xbf16>
    %c0_7 = arith.constant 0 : index
    %c0_8 = arith.constant 0 : index
    %13 = vector.load %arg4[%c0_7, %c0_8] : memref<32x48xf32, #tpu.memory_space<vmem>>, vector<32x48xf32>
    %14 = arith.truncf %13 : vector<32x48xf32> to vector<32x48xbf16>
    %cst_9 = arith.constant dense<0.000000e+00> : vector<8x48xf32>
    %15 = tpu.matmul %12, %14, %cst_9 {dimension_numbers = #tpu.dot_dimension_numbers<[1], [0], [0], [1], [0, 0, 1, 1], [], []>} : vector<8x32xbf16>, vector<32x48xbf16>, vector<8x48xf32> -> vector<8x48xf32>
    %c0_10 = arith.constant 0 : index
    %c0_11 = arith.constant 0 : index
    %16 = vector.load %arg5[%c0_10, %c0_11] : memref<1x48xf32, #tpu.memory_space<vmem>>, vector<1x48xf32>
    %17 = vector.broadcast %16 : vector<1x48xf32> to vector<8x48xf32>
    %18 = arith.addf %15, %17 : vector<8x48xf32>
    %c0_12 = arith.constant 0 : index
    %c0_13 = arith.constant 0 : index
    %19 = vector.load %arg6[%c0_12, %c0_13] : memref<32x48xf32, #tpu.memory_space<vmem>>, vector<32x48xf32>
    %20 = arith.truncf %19 : vector<32x48xf32> to vector<32x48xbf16>
    %cst_14 = arith.constant dense<0.000000e+00> : vector<8x48xf32>
    %21 = tpu.matmul %1, %20, %cst_14 {dimension_numbers = #tpu.dot_dimension_numbers<[1], [0], [0], [1], [0, 0, 1, 1], [], []>} : vector<8x32xbf16>, vector<32x48xbf16>, vector<8x48xf32> -> vector<8x48xf32>
    %22 = arith.addf %21, %18 : vector<8x48xf32>
    %c0_15 = arith.constant 0 : index
    %c0_16 = arith.constant 0 : index
    %23 = vector.load %arg7[%c0_15, %c0_16] : memref<8x48xf32, #tpu.memory_space<vmem>>, vector<8x48xf32>
    tpu.vector_store %arg7[%c0_15, %c0_16], %22 {strides = array<i32>} : memref<8x48xf32, #tpu.memory_space<vmem>>, vector<8x48xf32>,
    return
  }
  func.func @transform_0(%arg0: i32) -> (i32, i32) {
    %c0_i32 = arith.constant 0 : i32
    %c0_i32_0 = arith.constant 0 : i32
    return %arg0, %c0_i32 : i32, i32
  }
  func.func @transform_1(%arg0: i32) -> (i32, i32) {
    %c0_i32 = arith.constant 0 : i32
    %c0_i32_0 = arith.constant 0 : i32
    %c0_i32_1 = arith.constant 0 : i32
    return %c0_i32, %c0_i32_0 : i32, i32
  }
  func.func @transform_2(%arg0: i32) -> (i32, i32) {
    %c0_i32 = arith.constant 0 : i32
    %c0_i32_0 = arith.constant 0 : i32
    %c0_i32_1 = arith.constant 0 : i32
    return %c0_i32, %c0_i32_0 : i32, i32
  }
  func.func @transform_3(%arg0: i32) -> (i32, i32) {
    %c0_i32 = arith.constant 0 : i32
    %c0_i32_0 = arith.constant 0 : i32
    %c0_i32_1 = arith.constant 0 : i32
    return %c0_i32, %c0_i32_0 : i32, i32
  }
  func.func @transform_4(%arg0: i32) -> (i32, i32) {
    %c0_i32 = arith.constant 0 : i32
    %c0_i32_0 = arith.constant 0 : i32
    %c0_i32_1 = arith.constant 0 : i32
    return %c0_i32, %c0_i32_0 : i32, i32
  }
  func.func @transform_5(%arg0: i32) -> (i32, i32) {
    %c0_i32 = arith.constant 0 : i32
    %c0_i32_0 = arith.constant 0 : i32
    %c0_i32_1 = arith.constant 0 : i32
    return %c0_i32, %c0_i32_0 : i32, i32
  }
  func.func @transform_6(%arg0: i32) -> (i32, i32) {
    %c0_i32 = arith.constant 0 : i32
    %c0_i32_0 = arith.constant 0 : i32
    return %arg0, %c0_i32 : i32, i32
  }
}

</mosaic_0001>

<llo_original>
// kernel: resnet_block_fc.1
$region0: #{resnet_block_fc.1}
  #allocation0 [shape = 'u32[]', space=smem, size = 0x4, offset = 0x4, fixed_abs, tag = 'smem constant byte address 0x4 - core index']
  #allocation1 [shape = 'u32[144,128]{1,0:T(1,128)}', space=vmem, size = 0x12000, scoped, tag = 'internal scratch']
  %s0 = inlined_call_operand.hbm [shape: f32[32,32], index: 0, kind: input, shape index: {}]
  %s1 = inlined_call_operand.hbm [shape: f32[32,32], index: 1, kind: input, shape index: {}]
  %s2 = inlined_call_operand.vmem [shape: f32[1,32], index: 2, kind: input, shape index: {}]
  %s3 = inlined_call_operand.hbm [shape: f32[32,48], index: 3, kind: input, shape index: {}]
  %s4 = inlined_call_operand.vmem [shape: f32[1,48], index: 4, kind: input, shape index: {}]
  %s5 = inlined_call_operand.hbm [shape: f32[32,48], index: 5, kind: input, shape index: {}]
  %s6 = inlined_call_operand.hbm [shape: f32[32,48], index: 6, kind: output, shape index: {}]
  %s7 = sld [smem:[#allocation0]]
  $region73: #{resnet_block_fc.1} parent=0
    _
  %s9 = ssub.s32 1, %s7
  %s10 = scalar_select 0, %s9, %s7
  $region1: #{resnet_block_fc.1} parent=0
    #allocation2 [shape = 'u8[8192]{0}', space=vmem, size = 0x2000, scoped, tag = 'input window, operand 0']
    #allocation3 [shape = 's32[2]{0}', space=sflag, size = 0x8, scoped, tag = 'scoped memory for resnet_block_fc.1']
    #allocation4 [shape = 's32[2]{0}', space=sflag, size = 0x8, scoped, tag = 'scoped memory for resnet_block_fc.1']
    #allocation5 [shape = 'u8[16384]{0}', space=vmem, size = 0x4000, scoped, tag = 'input window, operand 1, single buffered']
    #allocation6 [shape = 's32[1]{0}', space=sflag, size = 0x4, scoped, tag = 'scoped memory for resnet_block_fc.1']
    #allocation7 [shape = 'u8[16384]{0}', space=vmem, size = 0x4000, scoped, tag = 'input window, operand 3, single buffered']
    #allocation8 [shape = 'u8[16384]{0}', space=vmem, size = 0x4000, scoped, tag = 'input window, operand 5, single buffered']
    #allocation9 [shape = 's32[1]{0}', space=sflag, size = 0x4, scoped, tag = 'scoped memory for resnet_block_fc.1']
    #allocation10 [shape = 'u8[8192]{0}', space=vmem, size = 0x2000, scoped, tag = 'output window, operand 0']
    %11 = vsyncpa [#allocation3], 0
    %s12 = scalar_lea.sflag [#allocation3], 1
    %13 = vsyncpa %s12, 0
    %14 = vsyncpa [#allocation6], 0
    %15 = vsyncpa [#allocation9], 0
    %16 = vsyncpa [#allocation4], 0
    %s17 = scalar_lea.sflag [#allocation4], 1
    %18 = vsyncpa %s17, 0
    loop: start=0, step=1, limit=6
    $region2: #{resnet_block_fc.1} parent=1 // loop_pre_header
      _
    $region3: #{resnet_block_fc.1} parent=1 // loop_header
      %s20 = sphi 0, %s24
      %p21 = scmp.ge.s32.totalorder %s20, 6
      %s30 = sphi 0, %s32
      %s33 = sphi 0, %s30
      %s34 = sphi 0, %s33
      %s50 = sphi 0, %s34
      %s54 = sphi 0, %s54
      %s56 = sphi 0, %s54
      %s57 = sphi 0, %s56
      %s71 = sphi 0, %s57
      %s75 = sphi 0, %s75
      %s77 = sphi 0, %s75
      %s78 = sphi 0, %s77
      %s92 = sphi 0, %s78
      %s96 = sphi 0, %s96
      %s98 = sphi 0, %s96
      %s99 = sphi 0, %s98
      %s113 = sphi 0, %s99
      %s117 = sphi 0, %s117
      %s119 = sphi 0, %s117
      %s120 = sphi 0, %s119
      %s134 = sphi 0, %s120
      %s138 = sphi 0, %s138
      %s140 = sphi 0, %s138
      %s141 = sphi 0, %s140
      %s155 = sphi 0, %s141
      %s161 = sphi 0, %s163
      %s164 = sphi 0, %s161
      %s165 = sphi 0, %s164
      %s181 = sphi 0, %s165
    $region4: #{resnet_block_fc.1} parent=1 // loop_header_branch
      %23 = sbr.rel (%p21) target = $region8
    $region5: #{resnet_block_fc.1} parent=1 // loop_body
      %s25 = ssub.s32 %s20, 1
      %s26 = ssub.s32 %s20, 2
      %s27 = sadd.s32 %s20, 1
      %s28 = ssub.s32 %s20, %s27
      %p29 = scmp.eq.s32.totalorder %s28, 0
      %s31 = sadd.s32 %s30, 1
      %s32 = scalar_select %p29, %s30, %s31
      %p35 = pneg %p29
      %p36 = scmp.eq.s32.totalorder %s20, 3
      %p37 = por %p35, %p36
      %p38 = scmp.ne.s32.totalorder %s30, %s33
      %p39 = scmp.eq.s32.totalorder %s20, 0
      %p40 = por %p38, %p39
      %p41 = scmp.ne.s32.totalorder %s30, %s33
      %p42 = scmp.eq.s32.totalorder %s25, 3
      %p43 = por %p41, %p42
      %p44 = scmp.ne.s32.totalorder %s33, %s34
      %p45 = scmp.eq.s32.totalorder %s25, 0
      %p46 = por %p44, %p45
      %p47 = scmp.ne.s32.totalorder %s33, %s34
      %p48 = scmp.eq.s32.totalorder %s26, 3
      %p49 = por %p47, %p48
      %p51 = scmp.ne.s32.totalorder %s34, %s50
      %p52 = scmp.eq.s32.totalorder %s26, 0
      %p53 = por %p51, %p52
      %s55 = sadd.s32 %s54, 1
      %p58 = scmp.eq.s32.totalorder %s20, 3
      %p59 = scmp.ne.s32.totalorder %s54, %s56
      %p60 = scmp.eq.s32.totalorder %s20, 0
      %p61 = por %p59, %p60
      %p62 = scmp.ne.s32.totalorder %s54, %s56
      %p63 = scmp.eq.s32.totalorder %s25, 3
      %p64 = por %p62, %p63
      %p65 = scmp.ne.s32.totalorder %s56, %s57
      %p66 = scmp.eq.s32.totalorder %s25, 0
      %p67 = por %p65, %p66
      %p68 = scmp.ne.s32.totalorder %s56, %s57
      %p69 = scmp.eq.s32.totalorder %s26, 3
      %p70 = por %p68, %p69
      %p72 = scmp.ne.s32.totalorder %s57, %s71
      %p73 = scmp.eq.s32.totalorder %s26, 0
      %p74 = por %p72, %p73
      %s76 = sadd.s32 %s75, 1
      %p79 = scmp.eq.s32.totalorder %s20, 3
      %p80 = scmp.ne.s32.totalorder %s75, %s77
      %p81 = scmp.eq.s32.totalorder %s20, 0
      %p82 = por %p80, %p81
      %p83 = scmp.ne.s32.totalorder %s75, %s77
      %p84 = scmp.eq.s32.totalorder %s25, 3
      %p85 = por %p83, %p84
      %p86 = scmp.ne.s32.totalorder %s77, %s78
      %p87 = scmp.eq.s32.totalorder %s25, 0
      %p88 = por %p86, %p87
      %p89 = scmp.ne.s32.totalorder %s77, %s78
      %p90 = scmp.eq.s32.totalorder %s26, 3
      %p91 = por %p89, %p90
      %p93 = scmp.ne.s32.totalorder %s78, %s92
      %p94 = scmp.eq.s32.totalorder %s26, 0
      %p95 = por %p93, %p94
      %s97 = sadd.s32 %s96, 1
      %p100 = scmp.eq.s32.totalorder %s20, 3
      %p101 = scmp.ne.s32.totalorder %s96, %s98
      %p102 = scmp.eq.s32.totalorder %s20, 0
      %p103 = por %p101, %p102
      %p104 = scmp.ne.s32.totalorder %s96, %s98
      %p105 = scmp.eq.s32.totalorder %s25, 3
      %p106 = por %p104, %p105
      %p107 = scmp.ne.s32.totalorder %s98, %s99
      %p108 = scmp.eq.s32.totalorder %s25, 0
      %p109 = por %p107, %p108
      %p110 = scmp.ne.s32.totalorder %s98, %s99
      %p111 = scmp.eq.s32.totalorder %s26, 3
      %p112 = por %p110, %p111
      %p114 = scmp.ne.s32.totalorder %s99, %s113
      %p115 = scmp.eq.s32.totalorder %s26, 0
      %p116 = por %p114, %p115
      %s118 = sadd.s32 %s117, 1
      %p121 = scmp.eq.s32.totalorder %s20, 3
      %p122 = scmp.ne.s32.totalorder %s117, %s119
      %p123 = scmp.eq.s32.totalorder %s20, 0
      %p124 = por %p122, %p123
      %p125 = scmp.ne.s32.totalorder %s117, %s119
      %p126 = scmp.eq.s32.totalorder %s25, 3
      %p127 = por %p125, %p126
      %p128 = scmp.ne.s32.totalorder %s119, %s120
      %p129 = scmp.eq.s32.totalorder %s25, 0
      %p130 = por %p128, %p129
      %p131 = scmp.ne.s32.totalorder %s119, %s120
      %p132 = scmp.eq.s32.totalorder %s26, 3
      %p133 = por %p131, %p132
      %p135 = scmp.ne.s32.totalorder %s120, %s134
      %p136 = scmp.eq.s32.totalorder %s26, 0
      %p137 = por %p135, %p136
      %s139 = sadd.s32 %s138, 1
      %p142 = scmp.eq.s32.totalorder %s20, 3
      %p143 = scmp.ne.s32.totalorder %s138, %s140
      %p144 = scmp.eq.s32.totalorder %s20, 0
      %p145 = por %p143, %p144
      %p146 = scmp.ne.s32.totalorder %s138, %s140
      %p147 = scmp.eq.s32.totalorder %s25, 3
      %p148 = por %p146, %p147
      %p149 = scmp.ne.s32.totalorder %s140, %s141
      %p150 = scmp.eq.s32.totalorder %s25, 0
      %p151 = por %p149, %p150
      %p152 = scmp.ne.s32.totalorder %s140, %s141
      %p153 = scmp.eq.s32.totalorder %s26, 3
      %p154 = por %p152, %p153
      %p156 = scmp.ne.s32.totalorder %s141, %s155
      %p157 = scmp.eq.s32.totalorder %s26, 0
      %p158 = por %p156, %p157
      %s159 = ssub.s32 %s20, %s27
      %p160 = scmp.eq.s32.totalorder %s159, 0
      %s162 = sadd.s32 %s161, 1
      %s163 = scalar_select %p160, %s161, %s162
      %p166 = pneg %p160
      %p167 = scmp.eq.s32.totalorder %s20, 3
      %p168 = por %p166, %p167
      %p169 = scmp.ne.s32.totalorder %s161, %s164
      %p170 = scmp.eq.s32.totalorder %s20, 0
      %p171 = por %p169, %p170
      %p172 = scmp.ne.s32.totalorder %s161, %s164
      %p173 = scmp.eq.s32.totalorder %s25, 3
      %p174 = por %p172, %p173
      %p175 = scmp.ne.s32.totalorder %s164, %s165
      %p176 = scmp.eq.s32.totalorder %s25, 0
      %p177 = por %p175, %p176
      %p178 = scmp.ne.s32.totalorder %s164, %s165
      %p179 = scmp.eq.s32.totalorder %s26, 3
      %p180 = por %p178, %p179
      %p182 = scmp.ne.s32.totalorder %s165, %s181
      %p183 = scmp.eq.s32.totalorder %s26, 0
      %p184 = por %p182, %p183
      %p185 = scmp.le.s32.totalorder 1, %s20
      %p186 = scmp.lt.s32.totalorder %s20, 5
      %p187 = pnand %p185, %p186
      %p188 = pneg %p187
      // Predicated region
      $region9: #{resnet_block_fc.1} parent=5 // pred_check
        _
      $region10: #{resnet_block_fc.1} parent=5 // pred_check_branch
        %190 = sbr.rel (%p187) target = $region12
      $region11: #{resnet_block_fc.1} parent=5 // pred_region
        %s191 = ssub.s32 %s20, 1
        // Predicated region
        $region13: #{resnet_block_fc.1} parent=11 // pred_check
          %p192 = pneg %p67
        $region14: #{resnet_block_fc.1} parent=11 // pred_check_branch
          %194 = sbr.rel (%p192) target = $region16
        $region15: #{resnet_block_fc.1} parent=11 // pred_region
          %s196 = ssub.s32 512, 512
          %197 = vsyncadd [#allocation6], %s196
          %s198 = sshll.u32 [#allocation5], 4
          %s199 = int_to_ptr.vmem [resolvable:$true] %s198
          %204 = dma.hbm_to_vmem [thread:$0]  %s1, 512, %s199, [#allocation6], 128, 128, 8
        $region16: #{resnet_block_fc.1} parent=11 // pred_fallthru
          _
        // Predicated region
        $region17: #{resnet_block_fc.1} parent=11 // pred_check
          %p205 = pneg %p88
        $region18: #{resnet_block_fc.1} parent=11 // pred_check_branch
          %207 = sbr.rel (%p205) target = $region20
        $region19: #{resnet_block_fc.1} parent=11 // pred_region
          _
        $region20: #{resnet_block_fc.1} parent=11 // pred_fallthru
          _
        // Predicated region
        $region21: #{resnet_block_fc.1} parent=11 // pred_check
          %p208 = pneg %p109
        $region22: #{resnet_block_fc.1} parent=11 // pred_check_branch
          %210 = sbr.rel (%p208) target = $region24
        $region23: #{resnet_block_fc.1} parent=11 // pred_region
          %s212 = ssub.s32 512, 512
          %213 = vsyncadd [#allocation6], %s212
          %s214 = sshll.u32 [#allocation7], 4
          %s215 = int_to_ptr.vmem [resolvable:$true] %s214
          %220 = dma.hbm_to_vmem [thread:$0]  %s3, 512, %s215, [#allocation6], 128, 128, 8
        $region24: #{resnet_block_fc.1} parent=11 // pred_fallthru
          _
        // Predicated region
        $region25: #{resnet_block_fc.1} parent=11 // pred_check
          %p221 = pneg %p130
        $region26: #{resnet_block_fc.1} parent=11 // pred_check_branch
          %223 = sbr.rel (%p221) target = $region28
        $region27: #{resnet_block_fc.1} parent=11 // pred_region
          _
        $region28: #{resnet_block_fc.1} parent=11 // pred_fallthru
          _
        // Predicated region
        $region29: #{resnet_block_fc.1} parent=11 // pred_check
          %p224 = pneg %p151
        $region30: #{resnet_block_fc.1} parent=11 // pred_check_branch
          %226 = sbr.rel (%p224) target = $region32
        $region31: #{resnet_block_fc.1} parent=11 // pred_region
          %s228 = ssub.s32 512, 512
          %229 = vsyncadd [#allocation9], %s228
          %s230 = sshll.u32 [#allocation8], 4
          %s231 = int_to_ptr.vmem [resolvable:$true] %s230
          %236 = dma.hbm_to_vmem [thread:$0]  %s5, 512, %s231, [#allocation9], 128, 128, 8
        $region32: #{resnet_block_fc.1} parent=11 // pred_fallthru
          _
      $region12: #{resnet_block_fc.1} parent=5 // pred_fallthru
        _
      %p237 = scmp.lt.s32.totalorder %s20, 4
      // Predicated region
      $region33: #{resnet_block_fc.1} parent=5 // pred_check
        %p238 = pneg %p237
      $region34: #{resnet_block_fc.1} parent=5 // pred_check_branch
        %240 = sbr.rel (%p238) target = $region36
      $region35: #{resnet_block_fc.1} parent=5 // pred_region
        // Predicated region
        $region37: #{resnet_block_fc.1} parent=35 // pred_check
          %p241 = pneg %p40
        $region38: #{resnet_block_fc.1} parent=35 // pred_check_branch
          %243 = sbr.rel (%p241) target = $region40
        $region39: #{resnet_block_fc.1} parent=35 // pred_region
          %s244 = sand.u32 %s30, 1
          %s245 = scalar_lea.sflag [#allocation3], %s244
          %s246 = sand.u32 %s30, 1
          %s247 = smul.addr %s246, 8
          %s248 = scalar_lea.vmem [#allocation2], %s247
          %s250 = ssub.s32 128, 128
          %251 = vsyncadd %s245, %s250
          %s252 = smul.addr %s20, 128
          %s253 = scalar_lea.hbm %s0, %s252
          %s255 = sshll.u32 %s248, 4
          %s256 = int_to_ptr.vmem [resolvable:$true] %s255
          %258 = dma.hbm_to_vmem [thread:$0]  %s253, 128, %s256, %s245
        $region40: #{resnet_block_fc.1} parent=35 // pred_fallthru
          _
      $region36: #{resnet_block_fc.1} parent=5 // pred_fallthru
        _
      %p259 = scmp.le.s32.totalorder 1, %s20
      %p260 = scmp.lt.s32.totalorder %s20, 5
      %p261 = pnand %p259, %p260
      %p262 = pneg %p261
      // Predicated region
      $region41: #{resnet_block_fc.1} parent=5 // pred_check
        _
      $region42: #{resnet_block_fc.1} parent=5 // pred_check_branch
        %264 = sbr.rel (%p261) target = $region44
      $region43: #{resnet_block_fc.1} parent=5 // pred_region
        %s265 = ssub.s32 %s20, 1
        %s266 = sand.u32 %s33, 1
        %s267 = scalar_lea.sflag [#allocation3], %s266
        %s268 = sand.u32 %s33, 1
        %s269 = smul.addr %s268, 8
        %s270 = scalar_lea.vmem [#allocation2], %s269
        // Predicated region
        $region45: #{resnet_block_fc.1} parent=43 // pred_check
          %p271 = pneg %p46
        $region46: #{resnet_block_fc.1} parent=43 // pred_check_branch
          %273 = sbr.rel (%p271) target = $region48
        $region47: #{resnet_block_fc.1} parent=43 // pred_region
          %274 = dma.done %s267, 128
        $region48: #{resnet_block_fc.1} parent=43 // pred_fallthru
          _
        // Predicated region
        $region49: #{resnet_block_fc.1} parent=43 // pred_check
          %p275 = pneg %p67
        $region50: #{resnet_block_fc.1} parent=43 // pred_check_branch
          %277 = sbr.rel (%p275) target = $region52
        $region51: #{resnet_block_fc.1} parent=43 // pred_region
          %278 = dma.done [#allocation6], 512
        $region52: #{resnet_block_fc.1} parent=43 // pred_fallthru
          _
        // Predicated region
        $region53: #{resnet_block_fc.1} parent=43 // pred_check
          %p279 = pneg %p109
        $region54: #{resnet_block_fc.1} parent=43 // pred_check_branch
          %281 = sbr.rel (%p279) target = $region56
        $region55: #{resnet_block_fc.1} parent=43 // pred_region
          %282 = dma.done [#allocation6], 512
        $region56: #{resnet_block_fc.1} parent=43 // pred_fallthru
          _
        // Predicated region
        $region57: #{resnet_block_fc.1} parent=43 // pred_check
          %p283 = pneg %p151
        $region58: #{resnet_block_fc.1} parent=43 // pred_check_branch
          %285 = sbr.rel (%p283) target = $region60
        $region59: #{resnet_block_fc.1} parent=43 // pred_region
          %286 = dma.done [#allocation9], 512
        $region60: #{resnet_block_fc.1} parent=43 // pred_fallthru
          _
        %s287 = sand.u32 %s33, 1
        %s288 = scalar_lea.sflag [#allocation3], %s287
        %s289 = sand.u32 %s33, 1
        %s290 = smul.addr %s289, 8
        %s291 = scalar_lea.vmem [#allocation2], %s290
        %p292 = pneg %p46
        %p293 = pneg %p43
        %p294 = pneg %p67
        %p295 = pneg %p64
        %p296 = pneg %p88
        %p297 = pneg %p85
        %p298 = pneg %p109
        %p299 = pneg %p106
        %p300 = pneg %p130
        %p301 = pneg %p127
        %p302 = pneg %p151
        %p303 = pneg %p148
        %p304 = pneg %p177
        %p305 = pneg %p174
        %s306 = sand.u32 %s164, 1
        %s307 = scalar_lea.sflag [#allocation4], %s306
        %s308 = sand.u32 %s164, 1
        %s309 = smul.addr %s308, 8
        %s310 = scalar_lea.vmem [#allocation10], %s309
        %v312 = vld [vmem:[%s270] sm:$0xff]
        %v313 = vpack.c.bf16 %v312, %v312
        %v314 = vmax.bf16 %v313, 0
        %v315 = vld [vmem:[#allocation5] sm:$0xff]
        %v316 = vld [vmem:[#allocation5 + $0x8] sm:$0xff]
        %v317 = vld [vmem:[#allocation5 + $0x10] sm:$0xff]
        %v318 = vld [vmem:[#allocation5 + $0x18] sm:$0xff]
        %v319 = vpack.c.bf16 %v316, %v315
        %v320 = vpack.c.bf16 %v318, %v317
        %v321 = vld [vmem:[%s2] sm:$0x1]
        %v323 = vlaneseq
        %v324 = vshrl.u32 %v323, 7
        %v325 = vsub.s32 0, %v324
        %v326 = vrot.slane %v321, %v325
        %vm328 = vcmask 261120
        %v330 = vsel %vm328, %v314, 0
        %332 = vmatprep.subr.bf16.mxu0 0
        %333 = vmatpush1.bf16.msra.mxu0 %v319
        %334 = vmatprep.subr.bf16.mxu0 0
        %335 = vmatpush1.bf16.msra.mxu0 %v320
        %336 = vmatprep.subr.bf16.mxu0 0
        %337 = vmatpush1.bf16.msra.mxu0 0
        %338 = vmatprep.subr.bf16.mxu0 0
        %339 = vmatpush1.bf16.msra.mxu0 0
        %340 = vmatprep.subr.bf16.mxu0 0
        %341 = vmatpush1.bf16.msra.mxu0 0
        %342 = vmatprep.subr.bf16.mxu0 0
        %343 = vmatpush1.bf16.msra.mxu0 0
        %344 = vmatprep.subr.bf16.mxu0 0
        %345 = vmatpush1.bf16.msra.mxu0 0
        %346 = vmatprep.subr.bf16.mxu0 0
        %347 = vmatpush1.bf16.msra.mxu0 0
        %348 = vmatprep.subr.bf16.mxu0 0
        %349 = vmatpush1.bf16.msra.mxu0 0
        %350 = vmatprep.subr.bf16.mxu0 0
        %351 = vmatpush1.bf16.msra.mxu0 0
        %352 = vmatprep.subr.bf16.mxu0 0
        %353 = vmatpush1.bf16.msra.mxu0 0
        %354 = vmatprep.subr.bf16.mxu0 0
        %355 = vmatpush1.bf16.msra.mxu0 0
        %356 = vmatprep.subr.bf16.mxu0 0
        %357 = vmatpush1.bf16.msra.mxu0 0
        %358 = vmatprep.subr.bf16.mxu0 0
        %359 = vmatpush1.bf16.msra.mxu0 0
        %360 = vmatprep.subr.bf16.mxu0 0
        %361 = vmatpush1.bf16.msra.mxu0 0
        %362 = vmatprep.subr.bf16.mxu0 0
        %363 = vmatpush1.bf16.msra.mxu0 0
        %364 = vmatprep.mubr.bf16.mxu0 0
        %365 = vmatmul.mubr.bf16.gmra.mrb[0].mxu0 %v330
        %v366 = vpop.f32.mrb[0].mxu0
        %v367 = vadd.f32 %v326, %v366
        %v368 = vpop.f32.mrb[0].mxu0
        %v369 = vpop.f32.mrb[0].mxu0
        %v370 = vpop.f32.mrb[0].mxu0
        %371 = vdwg.mxu0
        %v372 = vmax.f32 %v367, 0.0
        %v373 = vpack.c.bf16 %v372, %v372
        %v374 = vld [vmem:[#allocation7] sm:$0xff]
        %v375 = vld [vmem:[#allocation7 + $0x8] sm:$0xff]
        %v376 = vld [vmem:[#allocation7 + $0x10] sm:$0xff]
        %v377 = vld [vmem:[#allocation7 + $0x18] sm:$0xff]
        %v378 = vpack.c.bf16 %v375, %v374
        %v379 = vpack.c.bf16 %v377, %v376
        %v380 = vld [vmem:[%s4] sm:$0x1]
        %v382 = vlaneseq
        %v383 = vshrl.u32 %v382, 7
        %v384 = vsub.s32 0, %v383
        %v385 = vrot.slane %v380, %v384
        %v388 = vsel %vm328, %v373, 0
        %390 = vmatprep.subr.bf16.mxu0 0
        %391 = vmatpush1.bf16.msra.mxu0 %v378
        %392 = vmatprep.subr.bf16.mxu0 0
        %393 = vmatpush1.bf16.msra.mxu0 %v379
        %394 = vmatprep.subr.bf16.mxu0 0
        %395 = vmatpush1.bf16.msra.mxu0 0
        %396 = vmatprep.subr.bf16.mxu0 0
        %397 = vmatpush1.bf16.msra.mxu0 0
        %398 = vmatprep.subr.bf16.mxu0 0
        %399 = vmatpush1.bf16.msra.mxu0 0
        %400 = vmatprep.subr.bf16.mxu0 0
        %401 = vmatpush1.bf16.msra.mxu0 0
        %402 = vmatprep.subr.bf16.mxu0 0
        %403 = vmatpush1.bf16.msra.mxu0 0
        %404 = vmatprep.subr.bf16.mxu0 0
        %405 = vmatpush1.bf16.msra.mxu0 0
        %406 = vmatprep.subr.bf16.mxu0 0
        %407 = vmatpush1.bf16.msra.mxu0 0
        %408 = vmatprep.subr.bf16.mxu0 0
        %409 = vmatpush1.bf16.msra.mxu0 0
        %410 = vmatprep.subr.bf16.mxu0 0
        %411 = vmatpush1.bf16.msra.mxu0 0
        %412 = vmatprep.subr.bf16.mxu0 0
        %413 = vmatpush1.bf16.msra.mxu0 0
        %414 = vmatprep.subr.bf16.mxu0 0
        %415 = vmatpush1.bf16.msra.mxu0 0
        %416 = vmatprep.subr.bf16.mxu0 0
        %417 = vmatpush1.bf16.msra.mxu0 0
        %418 = vmatprep.subr.bf16.mxu0 0
        %419 = vmatpush1.bf16.msra.mxu0 0
        %420 = vmatprep.subr.bf16.mxu0 0
        %421 = vmatpush1.bf16.msra.mxu0 0
        %422 = vmatprep.mubr.bf16.mxu0 0
        %423 = vmatmul.mubr.bf16.gmra.mrb[0].mxu0 %v388
        %v424 = vpop.f32.mrb[0].mxu0
        %v425 = vadd.f32 %v385, %v424
        %v426 = vpop.f32.mrb[0].mxu0
        %v427 = vpop.f32.mrb[0].mxu0
        %v428 = vpop.f32.mrb[0].mxu0
        %429 = vdwg.mxu0
        %v430 = vld [vmem:[#allocation8] sm:$0xff]
        %v431 = vld [vmem:[#allocation8 + $0x8] sm:$0xff]
        %v432 = vld [vmem:[#allocation8 + $0x10] sm:$0xff]
        %v433 = vld [vmem:[#allocation8 + $0x18] sm:$0xff]
        %v434 = vpack.c.bf16 %v431, %v430
        %v435 = vpack.c.bf16 %v433, %v432
        %v437 = vsel %vm328, %v313, 0
        %439 = vmatprep.subr.bf16.mxu0 0
        %440 = vmatpush1.bf16.msra.mxu0 %v434
        %441 = vmatprep.subr.bf16.mxu0 0
        %442 = vmatpush1.bf16.msra.mxu0 %v435
        %443 = vmatprep.subr.bf16.mxu0 0
        %444 = vmatpush1.bf16.msra.mxu0 0
        %445 = vmatprep.subr.bf16.mxu0 0
        %446 = vmatpush1.bf16.msra.mxu0 0
        %447 = vmatprep.subr.bf16.mxu0 0
        %448 = vmatpush1.bf16.msra.mxu0 0
        %449 = vmatprep.subr.bf16.mxu0 0
        %450 = vmatpush1.bf16.msra.mxu0 0
        %451 = vmatprep.subr.bf16.mxu0 0
        %452 = vmatpush1.bf16.msra.mxu0 0
        %453 = vmatprep.subr.bf16.mxu0 0
        %454 = vmatpush1.bf16.msra.mxu0 0
        %455 = vmatprep.subr.bf16.mxu0 0
        %456 = vmatpush1.bf16.msra.mxu0 0
        %457 = vmatprep.subr.bf16.mxu0 0
        %458 = vmatpush1.bf16.msra.mxu0 0
        %459 = vmatprep.subr.bf16.mxu0 0
        %460 = vmatpush1.bf16.msra.mxu0 0
        %461 = vmatprep.subr.bf16.mxu0 0
        %462 = vmatpush1.bf16.msra.mxu0 0
        %463 = vmatprep.subr.bf16.mxu0 0
        %464 = vmatpush1.bf16.msra.mxu0 0
        %465 = vmatprep.subr.bf16.mxu0 0
        %466 = vmatpush1.bf16.msra.mxu0 0
        %467 = vmatprep.subr.bf16.mxu0 0
        %468 = vmatpush1.bf16.msra.mxu0 0
        %469 = vmatprep.subr.bf16.mxu0 0
        %470 = vmatpush1.bf16.msra.mxu0 0
        %471 = vmatprep.mubr.bf16.mxu0 0
        %472 = vmatmul.mubr.bf16.gmra.mrb[0].mxu0 %v437
        %v473 = vpop.f32.mrb[0].mxu0
        %v474 = vadd.f32 %v425, %v473
        %v475 = vpop.f32.mrb[0].mxu0
        %v476 = vpop.f32.mrb[0].mxu0
        %v477 = vpop.f32.mrb[0].mxu0
        %478 = vdwg.mxu0
        %vm479 = vcmask 392192
        %480 = vst.msk [vmem:[%s310] sm:$0xff] %vm479, %v474
        %s481 = sand.u32 %s164, 1
        %s482 = scalar_lea.sflag [#allocation4], %s481
        %s483 = sand.u32 %s164, 1
        %s484 = smul.addr %s483, 8
        %s485 = scalar_lea.vmem [#allocation10], %s484
        // Predicated region
        $region61: #{resnet_block_fc.1} parent=43 // pred_check
          %p486 = pneg %p174
        $region62: #{resnet_block_fc.1} parent=43 // pred_check_branch
          %488 = sbr.rel (%p486) target = $region64
        $region63: #{resnet_block_fc.1} parent=43 // pred_region
          %s490 = ssub.s32 128, 128
          %491 = vsyncadd %s482, %s490
          %s492 = smul.addr %s25, 128
          %s493 = scalar_lea.hbm %s6, %s492
          %s495 = sshll.u32 %s485, 4
          %s496 = int_to_ptr.vmem [resolvable:$true] %s495
          %498 = dma.vmem_to_hbm [thread:$0]  %s496, 128, %s493, %s482
        $region64: #{resnet_block_fc.1} parent=43 // pred_fallthru
          _
      $region44: #{resnet_block_fc.1} parent=5 // pred_fallthru
        _
      %p499 = scmp.le.s32.totalorder 2, %s20
      // Predicated region
      $region65: #{resnet_block_fc.1} parent=5 // pred_check
        %p500 = pneg %p499
      $region66: #{resnet_block_fc.1} parent=5 // pred_check_branch
        %502 = sbr.rel (%p500) target = $region68
      $region67: #{resnet_block_fc.1} parent=5 // pred_region
        %s503 = ssub.s32 %s20, 2
        // Predicated region
        $region69: #{resnet_block_fc.1} parent=67 // pred_check
          %p504 = pneg %p180
        $region70: #{resnet_block_fc.1} parent=67 // pred_check_branch
          %506 = sbr.rel (%p504) target = $region72
        $region71: #{resnet_block_fc.1} parent=67 // pred_region
          %s507 = sand.u32 %s165, 1
          %s508 = scalar_lea.sflag [#allocation4], %s507
          %s509 = sand.u32 %s165, 1
          %s510 = smul.addr %s509, 8
          %s511 = scalar_lea.vmem [#allocation10], %s510
          %512 = dma.done %s508, 128
        $region72: #{resnet_block_fc.1} parent=67 // pred_fallthru
          _
      $region68: #{resnet_block_fc.1} parent=5 // pred_fallthru
        _
    $region6: #{resnet_block_fc.1} parent=1 // loop_footer
      %s24 = sadd.s32 1, %s20
    $region7: #{resnet_block_fc.1} parent=1 // loop_footer_branch
      %19 = sbr.rel target = $region3
    $region8: #{resnet_block_fc.1} parent=1 // loop_exit
      _
    %513 = vsyncpa [#allocation3], 1
    %s514 = scalar_lea.sflag [#allocation3], 1
    %515 = vsyncpa %s514, 1
    %516 = vsyncpa [#allocation6], 1
    %517 = vsyncpa [#allocation9], 1
    %518 = vsyncpa [#allocation4], 1
    %s519 = scalar_lea.sflag [#allocation4], 1
    %520 = vsyncpa %s519, 1

</llo_original>
